<compile_context>
chip_gen: v5e
topology: v5e:2x2
jax: 0.10.0
libtpu: 0.0.40
codegen_flags: <defaults>
</compile_context>

<pallas_src>
import jax
import jax.numpy as jnp
from jax.experimental import pallas as pl
from jax.experimental.pallas import tpu as pltpu


_LANE = 128
_MAX_COLS = 1024                         # lane-dense column width target
_TARGET_BLOCK_BYTES = 2 * 1024 * 1024    # ~2 MiB per input block
_VMEM_LIMIT_BYTES = 32 * 1024 * 1024     # explicit scoped-VMEM budget (v5e/v6e/v7x safe)


def _add_kernel(x_ref, y_ref, o_ref):
    # Elementwise hot path: one lane-dense VMEM tile of x and y -> one output tile.
    o_ref[...] = x_ref[...] + y_ref[...]


def _sublane_granule(itemsize):
    # Native sublane packing: f32 -> 8, bf16 -> 16, int8/fp8 -> 32 rows.
    return max(8, 32 // itemsize)


def _choose_cols(total):
    """Largest multiple of 128 (<= _MAX_COLS) that divides `total`, or None."""
    c = min(_MAX_COLS, total)
    c = (c // _LANE) * _LANE
    while c >= _LANE:
        if total % c == 0:
            return c
        c -= _LANE
    return None


def _choose_row_block(rows, cols, itemsize, granule):
    """Row-block size: ~_TARGET_BLOCK_BYTES per input, dtype-aware granule,
    >= 2 grid steps when possible (v7x megacore), prefer even division."""
    br = (_TARGET_BLOCK_BYTES // (cols * itemsize)) // granule * granule
    br = max(granule, br)
    # Ensure at least 2 grid steps when rows is large enough (v7x: 2 TCs).
    half = (rows // 2) // granule * granule
    if half >= granule:
        br = min(br, half)
    if br >= rows:
        return rows  # full extent -> always a legal block shape
    # Prefer a block that divides rows evenly (no masked trailing block),
    # without shrinking below ~3/4 of the target.
    lo = max(granule, ((br * 3) // 4) // granule * granule)
    cand = br
    while cand >= lo:
        if rows % cand == 0:
            return cand
        cand -= granule
    return br  # masked tail block is still correct


def _pallas_add_2d(x2, y2, rows, cols, br, total, itemsize, dtype):
    grid = (pl.cdiv(rows, br),)
    return pl.pallas_call(
        _add_kernel,
        out_shape=jax.ShapeDtypeStruct((rows, cols), dtype),
        grid_spec=pltpu.PrefetchScalarGridSpec(
            num_scalar_prefetch=0,
            grid=grid,
            in_specs=[
                pl.BlockSpec((br, cols), lambda i: (i, 0)),
                pl.BlockSpec((br, cols), lambda i: (i, 0)),
            ],
            out_specs=pl.BlockSpec((br, cols), lambda i: (i, 0)),
        ),
        compiler_params=pltpu.CompilerParams(
            dimension_semantics=("parallel",),
            vmem_limit_bytes=_VMEM_LIMIT_BYTES,
        ),
        cost_estimate=pl.CostEstimate(
            flops=total, transcendentals=0, bytes_accessed=3 * total * itemsize
        ),
    )(x2, y2)


def _pallas_add_1d(xf, yf, total, itemsize, dtype):
    # Ragged fallback (total not a multiple of 128): 1-D blocks, trailing
    # partial block handled by Pallas' automatic store masking — no padding.
    bs = max(8 * _LANE, (_TARGET_BLOCK_BYTES // itemsize) // (8 * _LANE) * (8 * _LANE))
    if bs >= total:
        bs = total  # full extent -> always a legal block shape
    grid = (pl.cdiv(total, bs),)
    return pl.pallas_call(
        _add_kernel,
        out_shape=jax.ShapeDtypeStruct((total,), dtype),
        grid_spec=pltpu.PrefetchScalarGridSpec(
            num_scalar_prefetch=0,
            grid=grid,
            in_specs=[
                pl.BlockSpec((bs,), lambda i: (i,)),
                pl.BlockSpec((bs,), lambda i: (i,)),
            ],
            out_specs=pl.BlockSpec((bs,), lambda i: (i,)),
        ),
        compiler_params=pltpu.CompilerParams(
            dimension_semantics=("parallel",),
            vmem_limit_bytes=_VMEM_LIMIT_BYTES,
        ),
        cost_estimate=pl.CostEstimate(
            flops=total, transcendentals=0, bytes_accessed=3 * total * itemsize
        ),
    )(xf, yf)


def shared_decoder_forward(x, y):
    """Pallas implementation of Shared_Decoder.forward(x, y) (result = x + y)."""
    assert x.shape == y.shape and x.dtype == y.dtype
    orig_shape = x.shape
    total = x.size
    itemsize = x.dtype.itemsize

    cols = _choose_cols(total)
    if cols is not None:
        # Lane-dense 2-D slab, zero-copy reshape (no padding, no extra HBM passes).
        rows = total // cols
        granule = _sublane_granule(itemsize)
        br = _choose_row_block(rows, cols, itemsize, granule)
        x2 = x.reshape(rows, cols)
        y2 = y.reshape(rows, cols)
        out2 = _pallas_add_2d(x2, y2, rows, cols, br, total, itemsize, x.dtype)
        return out2.reshape(orig_shape)

    # Ragged total (not a multiple of 128): 1-D kernel with masked tail block.
    xf = x.reshape(-1)
    yf = y.reshape(-1)
    outf = _pallas_add_1d(xf, yf, total, itemsize, x.dtype)
    return outf.reshape(orig_shape)


if __name__ == "__main__":
    key = jax.random.PRNGKey(0)
    kx, ky = jax.random.split(key)

    # Small NCHW shapes consistent with a conv-style decoder input.
    x = jax.random.normal(kx, (2, 4, 16, 16), dtype=jnp.float32)
    y = jax.random.normal(ky, (2, 4, 16, 16), dtype=jnp.float32)

    out = shared_decoder_forward(x, y)
    jax.block_until_ready(out)

    # Correctness check against the plain-JAX reference of the chosen semantics.
    ref = x + y
    assert out.shape == ref.shape and out.dtype == ref.dtype
    assert jnp.allclose(out, ref, atol=1e-6, rtol=1e-6)

    # Exercise the ragged (non-multiple-of-128) fallback path as well.
    xr = jax.random.normal(kx, (3, 5, 7), dtype=jnp.float32)
    yr = jax.random.normal(ky, (3, 5, 7), dtype=jnp.float32)
    outr = shared_decoder_forward(xr, yr)
    jax.block_until_ready(outr)
    assert jnp.allclose(outr, xr + yr, atol=1e-6, rtol=1e-6)

    # Exercise a sub-32-bit dtype (bf16 sublane granule path).
    xb = jax.random.normal(kx, (4, 8, 16, 16), dtype=jnp.bfloat16)
    yb = jax.random.normal(ky, (4, 8, 16, 16), dtype=jnp.bfloat16)
    outb = shared_decoder_forward(xb, yb)
    jax.block_until_ready(outb)
    assert jnp.allclose(outb.astype(jnp.float32), (xb + yb).astype(jnp.float32),
                        atol=1e-2, rtol=1e-2)

    print("KERNEL_OK")
</pallas_src>

<mosaic_0001>
module attributes {stable_mosaic.version = 11 : i64} {
  func.func @_add_kernel(%arg0: i32, %arg1: memref<2x1024xf32, #tpu.memory_space<vmem>>, %arg2: memref<2x1024xf32, #tpu.memory_space<vmem>>, %arg3: memref<2x1024xf32, #tpu.memory_space<vmem>>) attributes {dimension_semantics = [#tpu.dimension_semantics<parallel>], iteration_bounds = array<i64: 1>, scalar_prefetch = 0 : i64, scratch_operands = 0 : i64, tpu.core_type = #tpu.core_type<tc>, window_params = [{transform_indices = @transform_0, window_bounds = array<i64: 2, 1024>}, {transform_indices = @transform_1, window_bounds = array<i64: 2, 1024>}, {transform_indices = @transform_2, window_bounds = array<i64: 2, 1024>}]} {
    %c0 = arith.constant 0 : index
    %c0_0 = arith.constant 0 : index
    %0 = vector.load %arg1[%c0, %c0_0] : memref<2x1024xf32, #tpu.memory_space<vmem>>, vector<2x1024xf32>
    %c0_1 = arith.constant 0 : index
    %c0_2 = arith.constant 0 : index
    %1 = vector.load %arg2[%c0_1, %c0_2] : memref<2x1024xf32, #tpu.memory_space<vmem>>, vector<2x1024xf32>
    %2 = arith.addf %0, %1 : vector<2x1024xf32>
    %c0_3 = arith.constant 0 : index
    %c0_4 = arith.constant 0 : index
    %3 = vector.load %arg3[%c0_3, %c0_4] : memref<2x1024xf32, #tpu.memory_space<vmem>>, vector<2x1024xf32>
    tpu.vector_store %arg3[%c0_3, %c0_4], %2 {strides = array<i32>} : memref<2x1024xf32, #tpu.memory_space<vmem>>, vector<2x1024xf32>,
    return
  }
  func.func @transform_0(%arg0: i32) -> (i32, i32) {
    %c0_i32 = arith.constant 0 : i32
    %c0_i32_0 = arith.constant 0 : i32
    return %arg0, %c0_i32 : i32, i32
  }
  func.func @transform_1(%arg0: i32) -> (i32, i32) {
    %c0_i32 = arith.constant 0 : i32
    %c0_i32_0 = arith.constant 0 : i32
    return %arg0, %c0_i32 : i32, i32
  }
  func.func @transform_2(%arg0: i32) -> (i32, i32) {
    %c0_i32 = arith.constant 0 : i32
    %c0_i32_0 = arith.constant 0 : i32
    return %arg0, %c0_i32 : i32, i32
  }
}

</mosaic_0001>

<llo_original>
// kernel: tpu_custom_call.1
$region0: #{tpu_custom_call.1}
  #allocation0 [shape = 'u32[]', space=smem, size = 0x4, offset = 0x4, fixed_abs, tag = 'smem constant byte address 0x4 - core index']
  #allocation1 [shape = 'u32[72,128]{1,0:T(1,128)}', space=vmem, size = 0x9000, scoped, tag = 'internal scratch']
  %s0 = inlined_call_operand.hbm [shape: f32[2,1024], index: 0, kind: input, shape index: {}]
  %s1 = inlined_call_operand.hbm [shape: f32[2,1024], index: 1, kind: input, shape index: {}]
  %s2 = inlined_call_operand.hbm [shape: f32[2,1024], index: 2, kind: output, shape index: {}]
  %s3 = sld [smem:[#allocation0]]
  $region26: #{tpu_custom_call.1} parent=0
    _
  %s5 = ssub.s32 1, %s3
  %s6 = scalar_select 0, %s5, %s3
  $region1: #{tpu_custom_call.1} parent=0
    #allocation2 [shape = 'u8[8192]{0}', space=vmem, size = 0x2000, scoped, tag = 'input window, operand 0, single buffered']
    #allocation3 [shape = 's32[1]{0}', space=sflag, size = 0x4, scoped, tag = 'scoped memory for tpu_custom_call.1']
    #allocation4 [shape = 's32[1]{0}', space=sflag, size = 0x4, scoped, tag = 'scoped memory for tpu_custom_call.1']
    #allocation5 [shape = 'u8[8192]{0}', space=vmem, size = 0x2000, scoped, tag = 'input window, operand 1, single buffered']
    #allocation6 [shape = 's32[1]{0}', space=sflag, size = 0x4, scoped, tag = 'scoped memory for tpu_custom_call.1']
    #allocation7 [shape = 'u8[8192]{0}', space=vmem, size = 0x2000, scoped, tag = 'output window, operand 0, single buffered']
    %7 = vsyncpa [#allocation3], 0
    %8 = vsyncpa [#allocation6], 0
    %9 = vsyncpa [#allocation4], 0
    // Predicated region
    $region2: #{tpu_custom_call.1} parent=1 // pred_check
      _
    $region3: #{tpu_custom_call.1} parent=1 // pred_check_branch
      %11 = sbr.rel (0) target = $region5
    $region4: #{tpu_custom_call.1} parent=1 // pred_region
      %13 = vsyncadd [#allocation3], 0
      %s15 = sshll.u32 %s0, 4
      %s16 = int_to_ptr.hbm [resolvable:$true] %s15
      %s17 = sshll.u32 [#allocation2], 4
      %s18 = int_to_ptr.vmem [resolvable:$true] %s17
      %20 = dma.hbm_to_vmem [thread:$0]  %s16, 256, %s18, [#allocation3]
    $region5: #{tpu_custom_call.1} parent=1 // pred_fallthru
      _
    // Predicated region
    $region6: #{tpu_custom_call.1} parent=1 // pred_check
      _
    $region7: #{tpu_custom_call.1} parent=1 // pred_check_branch
      %22 = sbr.rel (0) target = $region9
    $region8: #{tpu_custom_call.1} parent=1 // pred_region
      %24 = vsyncadd [#allocation6], 0
      %s26 = sshll.u32 %s1, 4
      %s27 = int_to_ptr.hbm [resolvable:$true] %s26
      %s28 = sshll.u32 [#allocation5], 4
      %s29 = int_to_ptr.vmem [resolvable:$true] %s28
      %31 = dma.hbm_to_vmem [thread:$0]  %s27, 256, %s29, [#allocation6]
    $region9: #{tpu_custom_call.1} parent=1 // pred_fallthru
      _
    // Predicated region
    $region10: #{tpu_custom_call.1} parent=1 // pred_check
      _
    $region11: #{tpu_custom_call.1} parent=1 // pred_check_branch
      %33 = sbr.rel (0) target = $region13
    $region12: #{tpu_custom_call.1} parent=1 // pred_region
      %35 = dma.done [#allocation3], 256
    $region13: #{tpu_custom_call.1} parent=1 // pred_fallthru
      _
    // Predicated region
    $region14: #{tpu_custom_call.1} parent=1 // pred_check
      _
    $region15: #{tpu_custom_call.1} parent=1 // pred_check_branch
      %37 = sbr.rel (0) target = $region17
    $region16: #{tpu_custom_call.1} parent=1 // pred_region
      %39 = dma.done [#allocation6], 256
    $region17: #{tpu_custom_call.1} parent=1 // pred_fallthru
      _
    %v40 = vld [vmem:[#allocation2] sm:$0xff]
    %v41 = vld [vmem:[#allocation2 + $0x8] sm:$0xff]
    %v42 = vld [vmem:[#allocation5] sm:$0xff]
    %v43 = vld [vmem:[#allocation5 + $0x8] sm:$0xff]
    %v44 = vadd.f32 %v40, %v42
    %v45 = vadd.f32 %v41, %v43
    %46 = vst [vmem:[#allocation7] sm:$0xff] %v44
    %47 = vst [vmem:[#allocation7 + $0x8] sm:$0xff] %v45
    // Predicated region
    $region18: #{tpu_custom_call.1} parent=1 // pred_check
      _
    $region19: #{tpu_custom_call.1} parent=1 // pred_check_branch
      %49 = sbr.rel (0) target = $region21
    $region20: #{tpu_custom_call.1} parent=1 // pred_region
      %51 = vsyncadd [#allocation4], 0
      %s53 = sshll.u32 [#allocation7], 4
      %s54 = int_to_ptr.vmem [resolvable:$true] %s53
      %s55 = sshll.u32 %s2, 4
      %s56 = int_to_ptr.hbm [resolvable:$true] %s55
      %58 = dma.vmem_to_hbm [thread:$0]  %s54, 256, %s56, [#allocation4]
    $region21: #{tpu_custom_call.1} parent=1 // pred_fallthru
      _
    // Predicated region
    $region22: #{tpu_custom_call.1} parent=1 // pred_check
      _
    $region23: #{tpu_custom_call.1} parent=1 // pred_check_branch
      %60 = sbr.rel (0) target = $region25
    $region24: #{tpu_custom_call.1} parent=1 // pred_region
      %62 = dma.done [#allocation4], 256
    $region25: #{tpu_custom_call.1} parent=1 // pred_fallthru
      _
    %63 = vsyncpa [#allocation3], 1
    %64 = vsyncpa [#allocation6], 1
    %65 = vsyncpa [#allocation4], 1

</llo_original>
